<compile_context>
chip_gen: v7x
topology: tpu7x:2x2x1
jax: 0.10.0
libtpu: 0.0.40
codegen_flags: <defaults>
</compile_context>

<pallas_src>
import jax
import jax.numpy as jnp
from jax.experimental import pallas as pl
from jax.experimental.pallas import tpu as pltpu

_LANE = 128


def _locked_dropout_kernel(mask_ref, x_ref, o_ref):
    # mask_ref: (1, bh_tile) -- VMEM-resident across the time grid axis.
    # x_ref / o_ref: (t_tile, bh_tile)
    o_ref[...] = x_ref[...] * mask_ref[...]


def _chip_kind():
    try:
        return jax.devices()[0].device_kind.lower()
    except Exception:
        return ""


def _target_block_bytes(kind):
    # Working set ~= 4x block (input + output, each double buffered).
    #   v5e : 16 MiB scoped-VMEM default -> ~2 MiB blocks
    #   v6e : 32 MiB scoped default      -> ~6 MiB blocks
    #   v7x : 32 MiB scoped / 64 MiB phys -> ~6 MiB blocks (amortizes the
    #         ~0.35 us per-step overhead at 3.2 TB/s HBM)
    if "v6" in kind or "v7" in kind:
        return 6 * 1024 * 1024
    return 2 * 1024 * 1024


def _round_down(x, m):
    return (x // m) * m


def _tile_plan(T, BH_pad, itemsize, target_bytes, split_for_megacore):
    """Pick (t_tile, bh_tile).

    t_tile is sublane-aligned (or the full T), bh_tile is a multiple of 128
    (or the full BH_pad), and block bytes are bounded by ~target_bytes.
    """
    sub = max(8, 32 // max(itemsize, 1))  # 8 rows (f32), 16 (bf16), 32 (i8)
    row_bytes = BH_pad * itemsize

    if sub * row_bytes <= target_bytes:
        # Full lane width fits in one block row group: stream over time only.
        bh_tile = BH_pad
        t_tile = max(sub, _round_down(target_bytes // row_bytes, sub))
        if t_tile >= T:
            t_tile = T  # full time axis (always a legal block dim)
    else:
        # Row too wide for the budget: minimal time tile, tile the lane axis.
        t_tile = sub if T > sub else T
        bh_tile = max(_LANE, _round_down(target_bytes // (max(t_tile, 1) * itemsize), _LANE))
        bh_tile = min(bh_tile, BH_pad)

    # On v7x, guarantee >= 2 grid steps when possible so the "parallel" axes
    # can be sharded across its two TensorCores.
    if split_for_megacore and pl.cdiv(T, t_tile) * pl.cdiv(BH_pad, bh_tile) < 2:
        t_half = _round_down(pl.cdiv(T, 2), sub)
        if sub <= t_half < T:
            t_tile = t_half
        else:
            bh_half = pl.cdiv(BH_pad // _LANE, 2) * _LANE
            if _LANE <= bh_half < BH_pad:
                bh_tile = bh_half

    return t_tile, bh_tile


def locked_dropout(x, key, dropout_rate=0.5, training=True, donate_input=False):
    """Pallas implementation of LockedDropout.forward.

    x: (T, B, H) array (time-major). Returns x unchanged when not training or
    when dropout_rate == 0.  `donate_input=True` aliases the activation buffer
    into the output (saves an activation-sized HBM allocation) — only enable
    it when the caller does not use `x` afterwards.
    """
    # NOTE: Python-level check; dropout_rate/training must be static (not traced).
    if (not training) or (not dropout_rate):
        return x

    keep_prob = 1.0 - float(dropout_rate)
    T, B, H = x.shape
    BH = B * H
    itemsize = jnp.dtype(x.dtype).itemsize

    x2d = x.reshape(T, BH)

    # Pad the lane axis to a multiple of 128 so every store is a full,
    # unmasked vst; the padding is sliced off after the call.
    BH_pad = max(_LANE, ((BH + _LANE - 1) // _LANE) * _LANE)
    if BH_pad != BH:
        x2d = jnp.pad(x2d, ((0, 0), (0, BH_pad - BH)))

    # Sample the locked mask once (same mask for every time step), pre-scaled
    # by 1/keep_prob, in x's dtype (matches PyTorch: mask created in x.dtype).
    keep = jax.random.bernoulli(key, p=keep_prob, shape=(1, BH))
    mask = jnp.where(keep, jnp.float32(1.0 / keep_prob),
                     jnp.float32(0.0)).astype(x.dtype)
    if BH_pad != BH:
        mask = jnp.pad(mask, ((0, 0), (0, BH_pad - BH)))

    kind = _chip_kind()
    t_tile, bh_tile = _tile_plan(
        T, BH_pad, itemsize,
        target_bytes=_target_block_bytes(kind),
        split_for_megacore=("v7" in kind))
    grid = (pl.cdiv(T, t_tile), pl.cdiv(BH_pad, bh_tile))

    # Pure memory-bound op: read x + mask once, write y once.
    cost = pl.CostEstimate(
        flops=T * BH,
        transcendentals=0,
        bytes_accessed=(2 * T * BH_pad + BH_pad) * itemsize)

    kwargs = {}
    if donate_input:
        # x2d is input index 1 (after the mask); safe because every output
        # element is fully overwritten.
        kwargs["input_output_aliases"] = {1: 0}

    y2d = pl.pallas_call(
        _locked_dropout_kernel,
        out_shape=jax.ShapeDtypeStruct((T, BH_pad), x.dtype),
        grid=grid,
        in_specs=[
            # Mask: constant block index along the time axis -> VMEM-resident.
            pl.BlockSpec((1, bh_tile), lambda t, c: (0, c)),
            # Activations: lane-dense (t_tile, bh_tile) tiles.
            pl.BlockSpec((t_tile, bh_tile), lambda t, c: (t, c)),
        ],
        out_specs=pl.BlockSpec((t_tile, bh_tile), lambda t, c: (t, c)),
        compiler_params=pltpu.CompilerParams(
            dimension_semantics=("parallel", "parallel")),
        cost_estimate=cost,
        **kwargs,
    )(mask, x2d)

    if BH_pad != BH:
        y2d = y2d[:, :BH]
    return y2d.reshape(T, B, H)


def _check(x, y, dropout_rate):
    keep_prob = 1.0 - dropout_rate
    zero_pattern = (y == 0.0)
    # Mask (zero pattern) must be identical across the time axis.
    assert bool(jnp.all(zero_pattern == zero_pattern[0:1])), "mask not locked over time"
    # Non-dropped entries must equal x / keep_prob.
    nz = ~zero_pattern
    assert bool(jnp.allclose(jnp.where(nz, y, 0.0),
                             jnp.where(nz, x / keep_prob, 0.0),
                             rtol=1e-6, atol=1e-6)), "scaling mismatch"
    # Some entries should actually be dropped (p=0.5).
    assert bool(jnp.any(zero_pattern)), "nothing was dropped"


if __name__ == "__main__":
    key = jax.random.PRNGKey(0)
    dropout_rate = 0.5
    mask_key = jax.random.PRNGKey(42)

    # Case 1: BH already a multiple of 128.
    T, B, H = 8, 4, 32  # (seq, batch, hidden), BH = 128
    x = jax.random.normal(key, (T, B, H), dtype=jnp.float32)
    y = locked_dropout(x, key=mask_key, dropout_rate=dropout_rate, training=True)
    y = jax.block_until_ready(y)
    _check(x, y, dropout_rate)

    # Case 2: BH not a multiple of 128 -> exercises the lane-padding path.
    T2, B2, H2 = 6, 2, 10  # BH = 20, padded to 128
    x2 = jax.random.normal(jax.random.PRNGKey(1), (T2, B2, H2), dtype=jnp.float32)
    y2 = locked_dropout(x2, key=mask_key, dropout_rate=dropout_rate, training=True)
    y2 = jax.block_until_ready(y2)
    _check(x2, y2, dropout_rate)

    # Eval mode / zero rate: identity.
    y_eval = locked_dropout(x, key=mask_key, dropout_rate=dropout_rate, training=False)
    assert bool(jnp.all(y_eval == x))
    y_zero = locked_dropout(x, key=mask_key, dropout_rate=0.0, training=True)
    assert bool(jnp.all(y_zero == x))

    print("KERNEL_OK")
</pallas_src>

<mosaic_0001>
module attributes {stable_mosaic.version = 11 : i64} {
  func.func @_locked_dropout_kernel(%arg0: i32, %arg1: i32, %arg2: memref<1x128xf32, #tpu.memory_space<vmem>>, %arg3: memref<8x128xf32, #tpu.memory_space<vmem>>, %arg4: memref<8x128xf32, #tpu.memory_space<vmem>>) attributes {dimension_semantics = [#tpu.dimension_semantics<parallel>, #tpu.dimension_semantics<parallel>], iteration_bounds = array<i64: 1, 1>, scalar_prefetch = 0 : i64, scratch_operands = 0 : i64, tpu.core_type = #tpu.core_type<tc>, window_params = [{transform_indices = @transform_0, window_bounds = array<i64: 1, 128>}, {transform_indices = @transform_1, window_bounds = array<i64: 8, 128>}, {transform_indices = @transform_2, window_bounds = array<i64: 8, 128>}]} {
    %c0 = arith.constant 0 : index
    %c0_0 = arith.constant 0 : index
    %0 = vector.load %arg3[%c0, %c0_0] : memref<8x128xf32, #tpu.memory_space<vmem>>, vector<8x128xf32>
    %c0_1 = arith.constant 0 : index
    %c0_2 = arith.constant 0 : index
    %1 = vector.load %arg2[%c0_1, %c0_2] : memref<1x128xf32, #tpu.memory_space<vmem>>, vector<1x128xf32>
    %2 = vector.broadcast %1 : vector<1x128xf32> to vector<8x128xf32>
    %3 = arith.mulf %0, %2 : vector<8x128xf32>
    %c0_3 = arith.constant 0 : index
    %c0_4 = arith.constant 0 : index
    %4 = vector.load %arg4[%c0_3, %c0_4] : memref<8x128xf32, #tpu.memory_space<vmem>>, vector<8x128xf32>
    tpu.vector_store %arg4[%c0_3, %c0_4], %3 {strides = array<i32>} : memref<8x128xf32, #tpu.memory_space<vmem>>, vector<8x128xf32>,
    return
  }
  func.func @transform_0(%arg0: i32, %arg1: i32) -> (i32, i32) {
    %c0_i32 = arith.constant 0 : i32
    %c0_i32_0 = arith.constant 0 : i32
    return %c0_i32, %arg1 : i32, i32
  }
  func.func @transform_1(%arg0: i32, %arg1: i32) -> (i32, i32) {
    %c0_i32 = arith.constant 0 : i32
    return %arg0, %arg1 : i32, i32
  }
  func.func @transform_2(%arg0: i32, %arg1: i32) -> (i32, i32) {
    %c0_i32 = arith.constant 0 : i32
    return %arg0, %arg1 : i32, i32
  }
}

</mosaic_0001>

<llo_original>
// kernel: tpu_custom_call.1
$region0: #{tpu_custom_call.1}
  #allocation0 [shape = 'u32[]', space=smem, size = 0x4, offset = 0x4, fixed_abs, tag = 'smem constant byte address 0x4 - core index']
  #allocation1 [shape = 'u32[144,128]{1,0:T(1,128)}', space=vmem, size = 0x12000, scoped, tag = 'internal scratch']
  %s0 = inlined_call_operand.hbm [shape: f32[1,128], index: 0, kind: input, shape index: {}]
  %s1 = inlined_call_operand.hbm [shape: f32[8,128], index: 1, kind: input, shape index: {}]
  %s2 = inlined_call_operand.hbm [shape: f32[8,128], index: 2, kind: output, shape index: {}]
  %s3 = sld [smem:[#allocation0]]
  $region26: #{tpu_custom_call.1} parent=0
    _
  %s5 = ssub.s32 1, %s3
  %s6 = scalar_select 0, %s5, %s3
  $region1: #{tpu_custom_call.1} parent=0
    #allocation2 [shape = 'u8[512]{0}', space=vmem, size = 0x400, scoped, tag = 'input window, operand 0, single buffered']
    #allocation3 [shape = 's32[1]{0}', space=sflag, size = 0x4, scoped, tag = 'scoped memory for tpu_custom_call.1']
    #allocation4 [shape = 's32[1]{0}', space=sflag, size = 0x4, scoped, tag = 'scoped memory for tpu_custom_call.1']
    #allocation5 [shape = 'u8[4096]{0}', space=vmem, size = 0x1000, scoped, tag = 'input window, operand 1, single buffered']
    #allocation6 [shape = 's32[1]{0}', space=sflag, size = 0x4, scoped, tag = 'scoped memory for tpu_custom_call.1']
    #allocation7 [shape = 'u8[4096]{0}', space=vmem, size = 0x1000, scoped, tag = 'output window, operand 0, single buffered']
    %7 = vsyncpa [#allocation3], 0
    %8 = vsyncpa [#allocation6], 0
    %9 = vsyncpa [#allocation4], 0
    // Predicated region
    $region2: #{tpu_custom_call.1} parent=1 // pred_check
      _
    $region3: #{tpu_custom_call.1} parent=1 // pred_check_branch
      %11 = sbr.rel (0) target = $region5
    $region4: #{tpu_custom_call.1} parent=1 // pred_region
      %s13 = ssub.s32 16, 16
      %14 = vsyncadd [#allocation3], %s13
      %s16 = sshll.u32 [#allocation2], 4
      %s17 = int_to_ptr.vmem [resolvable:$true] %s16
      %19 = dma.hbm_to_vmem [thread:$0]  %s0, 16, %s17, [#allocation3]
    $region5: #{tpu_custom_call.1} parent=1 // pred_fallthru
      _
    // Predicated region
    $region6: #{tpu_custom_call.1} parent=1 // pred_check
      _
    $region7: #{tpu_custom_call.1} parent=1 // pred_check_branch
      %21 = sbr.rel (0) target = $region9
    $region8: #{tpu_custom_call.1} parent=1 // pred_region
      %s23 = ssub.s32 128, 128
      %24 = vsyncadd [#allocation6], %s23
      %s26 = sshll.u32 [#allocation5], 4
      %s27 = int_to_ptr.vmem [resolvable:$true] %s26
      %29 = dma.hbm_to_vmem [thread:$0]  %s1, 128, %s27, [#allocation6]
    $region9: #{tpu_custom_call.1} parent=1 // pred_fallthru
      _
    // Predicated region
    $region10: #{tpu_custom_call.1} parent=1 // pred_check
      _
    $region11: #{tpu_custom_call.1} parent=1 // pred_check_branch
      %31 = sbr.rel (0) target = $region13
    $region12: #{tpu_custom_call.1} parent=1 // pred_region
      %32 = dma.done [#allocation3], 16
    $region13: #{tpu_custom_call.1} parent=1 // pred_fallthru
      _
    // Predicated region
    $region14: #{tpu_custom_call.1} parent=1 // pred_check
      _
    $region15: #{tpu_custom_call.1} parent=1 // pred_check_branch
      %34 = sbr.rel (0) target = $region17
    $region16: #{tpu_custom_call.1} parent=1 // pred_region
      %35 = dma.done [#allocation6], 128
    $region17: #{tpu_custom_call.1} parent=1 // pred_fallthru
      _
    %v36 = vld [vmem:[#allocation5] sm:$0xff]
    %v37 = vld [vmem:[#allocation2] sm:$0x1]
    %v39 = vlaneseq
    %v40 = vshrl.u32 %v39, 7
    %v41 = vsub.s32 0, %v40
    %v42 = vrot.slane %v37, %v41
    %v44 = vmul.f32 %v36, %v42
    %45 = vst [vmem:[#allocation7] sm:$0xff] %v44
    // Predicated region
    $region18: #{tpu_custom_call.1} parent=1 // pred_check
      _
    $region19: #{tpu_custom_call.1} parent=1 // pred_check_branch
      %47 = sbr.rel (0) target = $region21
    $region20: #{tpu_custom_call.1} parent=1 // pred_region
      %s49 = ssub.s32 128, 128
      %50 = vsyncadd [#allocation4], %s49
      %s52 = sshll.u32 [#allocation7], 4
      %s53 = int_to_ptr.vmem [resolvable:$true] %s52
      %55 = dma.vmem_to_hbm [thread:$0]  %s53, 128, %s2, [#allocation4]
    $region21: #{tpu_custom_call.1} parent=1 // pred_fallthru
      _
    // Predicated region
    $region22: #{tpu_custom_call.1} parent=1 // pred_check
      _
    $region23: #{tpu_custom_call.1} parent=1 // pred_check_branch
      %57 = sbr.rel (0) target = $region25
    $region24: #{tpu_custom_call.1} parent=1 // pred_region
      %58 = dma.done [#allocation4], 128
    $region25: #{tpu_custom_call.1} parent=1 // pred_fallthru
      _
    %59 = vsyncpa [#allocation3], 1
    %60 = vsyncpa [#allocation6], 1
    %61 = vsyncpa [#allocation4], 1

</llo_original>
